<compile_context>
chip_gen: v5e
topology: v5e:2x2
jax: 0.10.0
libtpu: 0.0.40
codegen_flags: <defaults>
</compile_context>

<pallas_src>
import functools

import jax
import jax.numpy as jnp
from jax.experimental import pallas as pl
from jax.experimental.pallas import tpu as pltpu


def _round_up(n, m):
    return ((n + m - 1) // m) * m


def _ae_kernel(x_ref, w1_ref, b1_ref, w2_ref, b2_ref, o_ref):
    # encoder: h = ReLU(x @ W1 + b1)   (MXU in bf16/f32 inputs, f32 accumulate)
    h = jnp.dot(x_ref[...], w1_ref[...], preferred_element_type=jnp.float32)
    h = jnp.maximum(h + b1_ref[...], 0.0)            # bias + ReLU in f32
    # decoder: y = sigmoid(h @ W2 + b2)
    y = jnp.dot(h.astype(w2_ref.dtype), w2_ref[...],
                preferred_element_type=jnp.float32)
    y = y + b2_ref[...]
    o_ref[...] = jax.nn.sigmoid(y).astype(o_ref.dtype)


@functools.partial(jax.jit, static_argnames=("tm", "use_bf16"))
def autoencoder_forward(x, w1, b1, w2, b2, *, tm=256, use_bf16=True):
    """x: (B, input_dim). w1: (input_dim, enc), w2: (enc, input_dim).
    Returns (B, input_dim) in x.dtype."""
    B, d_in = x.shape
    d_enc = w1.shape[1]
    out_dtype = x.dtype
    b1 = b1.reshape(1, -1)
    b2 = b2.reshape(1, -1)

    # Lane-dense padding: every last dim becomes a multiple of 128.
    d_in_p = _round_up(d_in, 128)
    d_enc_p = _round_up(d_enc, 128)

    # Row tile: as large as requested (multiple of 8), never larger than the
    # padded batch. Padding the batch to a multiple of tm handles ragged B.
    tm_eff = min(_round_up(tm, 8), _round_up(B, 8))
    B_p = _round_up(B, tm_eff)
    grid = (B_p // tm_eff,)

    mxu_dtype = jnp.bfloat16 if use_bf16 else jnp.float32
    bpe = jnp.dtype(mxu_dtype).itemsize
    out_bpe = jnp.dtype(out_dtype).itemsize

    # Zero padding keeps the math exact: padded x cols / W rows contribute 0,
    # padded encoder cols give ReLU(0)=0, padded output cols are sliced off.
    x_p = jnp.zeros((B_p, d_in_p), mxu_dtype).at[:B, :d_in].set(x.astype(mxu_dtype))
    w1_p = jnp.zeros((d_in_p, d_enc_p), mxu_dtype).at[:d_in, :d_enc].set(w1.astype(mxu_dtype))
    w2_p = jnp.zeros((d_enc_p, d_in_p), mxu_dtype).at[:d_enc, :d_in].set(w2.astype(mxu_dtype))
    b1_p = jnp.zeros((1, d_enc_p), jnp.float32).at[:, :d_enc].set(b1.astype(jnp.float32))
    b2_p = jnp.zeros((1, d_in_p), jnp.float32).at[:, :d_in].set(b2.astype(jnp.float32))

    # VMEM budget: double-buffered x/out tiles + resident weights/biases + h.
    tile_bytes = (
        2 * tm_eff * d_in_p * bpe          # x tile, double-buffered
        + 2 * tm_eff * d_in_p * out_bpe    # out tile, double-buffered
        + 2 * d_in_p * d_enc_p * bpe       # W1 + W2 resident
        + (d_enc_p + d_in_p) * 4           # biases
        + 2 * tm_eff * d_enc_p * 4         # f32 intermediates (h etc.)
    )
    vmem_limit = int(min(max(2 * tile_bytes, 16 << 20), 64 << 20))

    cost = pl.CostEstimate(
        flops=4 * B_p * d_in_p * d_enc_p,          # two matmuls, 2*M*N*K each
        transcendentals=B_p * d_in_p,              # sigmoid exp per output elem
        bytes_accessed=(B_p * d_in_p * (bpe + out_bpe)
                        + 2 * d_in_p * d_enc_p * bpe
                        + (d_in_p + d_enc_p) * 4),
    )

    out_p = pl.pallas_call(
        _ae_kernel,
        out_shape=jax.ShapeDtypeStruct((B_p, d_in_p), out_dtype),
        grid_spec=pltpu.PrefetchScalarGridSpec(
            num_scalar_prefetch=0,
            grid=grid,
            in_specs=[
                pl.BlockSpec((tm_eff, d_in_p), lambda i: (i, 0)),   # x rows
                pl.BlockSpec((d_in_p, d_enc_p), lambda i: (0, 0)),  # W1 (resident)
                pl.BlockSpec((1, d_enc_p), lambda i: (0, 0)),       # b1
                pl.BlockSpec((d_enc_p, d_in_p), lambda i: (0, 0)),  # W2 (resident)
                pl.BlockSpec((1, d_in_p), lambda i: (0, 0)),        # b2
            ],
            out_specs=pl.BlockSpec((tm_eff, d_in_p), lambda i: (i, 0)),
        ),
        compiler_params=pltpu.CompilerParams(
            dimension_semantics=("parallel",),   # batch axis shards across TCs on v7x
            vmem_limit_bytes=vmem_limit,
        ),
        cost_estimate=cost,
    )(x_p, w1_p, b1_p, w2_p, b2_p)

    return out_p[:B, :d_in]


def init_params(key, input_dim, encoding_dim):
    """Deterministic init mimicking PyTorch nn.Linear (uniform +-1/sqrt(fan_in))."""
    k1, k2, k3, k4 = jax.random.split(key, 4)
    bound1 = 1.0 / jnp.sqrt(input_dim)
    bound2 = 1.0 / jnp.sqrt(encoding_dim)
    w1 = jax.random.uniform(k1, (input_dim, encoding_dim), jnp.float32, -bound1, bound1)
    b1 = jax.random.uniform(k2, (1, encoding_dim), jnp.float32, -bound1, bound1)
    w2 = jax.random.uniform(k3, (encoding_dim, input_dim), jnp.float32, -bound2, bound2)
    b2 = jax.random.uniform(k4, (1, input_dim), jnp.float32, -bound2, bound2)
    return w1, b1, w2, b2


def reference_forward(x, w1, b1, w2, b2):
    h = jnp.maximum(x @ w1 + b1, 0.0)
    return jax.nn.sigmoid(h @ w2 + b2)


if __name__ == "__main__":
    key = jax.random.PRNGKey(0)
    batch, input_dim, encoding_dim = 16, 64, 32

    kx, kp = jax.random.split(key)
    x = jax.random.uniform(kx, (batch, input_dim), jnp.float32)  # [0,1] like pixels
    w1, b1, w2, b2 = init_params(kp, input_dim, encoding_dim)

    out = jax.block_until_ready(autoencoder_forward(x, w1, b1, w2, b2))
    ref = reference_forward(x, w1, b1, w2, b2)
    assert out.shape == (batch, input_dim)
    # bf16 MXU inputs -> loosened tolerance vs f32 reference.
    assert jnp.allclose(out, ref, atol=2e-2, rtol=2e-2), "mismatch vs. JAX reference"

    # Ragged batch (not a multiple of 8 / row tile) exercises the padded path.
    out_r = jax.block_until_ready(autoencoder_forward(x[:10], w1, b1, w2, b2))
    ref_r = reference_forward(x[:10], w1, b1, w2, b2)
    assert out_r.shape == (10, input_dim)
    assert jnp.allclose(out_r, ref_r, atol=2e-2, rtol=2e-2), "ragged-batch mismatch"

    print("KERNEL_OK")
</pallas_src>

<mosaic_0001>
module attributes {stable_mosaic.version = 11 : i64} {
  func.func @_ae_kernel(%arg0: i32, %arg1: memref<16x128xbf16, #tpu.memory_space<vmem>>, %arg2: memref<128x128xbf16, #tpu.memory_space<vmem>>, %arg3: memref<1x128xf32, #tpu.memory_space<vmem>>, %arg4: memref<128x128xbf16, #tpu.memory_space<vmem>>, %arg5: memref<1x128xf32, #tpu.memory_space<vmem>>, %arg6: memref<16x128xf32, #tpu.memory_space<vmem>>) attributes {dimension_semantics = [#tpu.dimension_semantics<parallel>], iteration_bounds = array<i64: 1>, scalar_prefetch = 0 : i64, scratch_operands = 0 : i64, tpu.core_type = #tpu.core_type<tc>, window_params = [{transform_indices = @transform_0, window_bounds = array<i64: 16, 128>}, {pipeline_mode = #tpu.pipeline_mode<synchronous>, transform_indices = @transform_1, window_bounds = array<i64: 128, 128>}, {pipeline_mode = #tpu.pipeline_mode<synchronous>, transform_indices = @transform_2, window_bounds = array<i64: 1, 128>}, {pipeline_mode = #tpu.pipeline_mode<synchronous>, transform_indices = @transform_3, window_bounds = array<i64: 128, 128>}, {pipeline_mode = #tpu.pipeline_mode<synchronous>, transform_indices = @transform_4, window_bounds = array<i64: 1, 128>}, {transform_indices = @transform_5, window_bounds = array<i64: 16, 128>}]} {
    %c0 = arith.constant 0 : index
    %c0_0 = arith.constant 0 : index
    %0 = vector.load %arg1[%c0, %c0_0] : memref<16x128xbf16, #tpu.memory_space<vmem>>, vector<16x128xbf16>
    %c0_1 = arith.constant 0 : index
    %c0_2 = arith.constant 0 : index
    %1 = vector.load %arg2[%c0_1, %c0_2] : memref<128x128xbf16, #tpu.memory_space<vmem>>, vector<128x128xbf16>
    %cst = arith.constant dense<0.000000e+00> : vector<16x128xf32>
    %2 = tpu.matmul %0, %1, %cst {dimension_numbers = #tpu.dot_dimension_numbers<[1], [0], [0], [1], [0, 0, 1, 1], [], []>} : vector<16x128xbf16>, vector<128x128xbf16>, vector<16x128xf32> -> vector<16x128xf32>
    %c0_3 = arith.constant 0 : index
    %c0_4 = arith.constant 0 : index
    %3 = vector.load %arg3[%c0_3, %c0_4] : memref<1x128xf32, #tpu.memory_space<vmem>>, vector<1x128xf32>
    %4 = vector.broadcast %3 : vector<1x128xf32> to vector<16x128xf32>
    %5 = arith.addf %2, %4 : vector<16x128xf32>
    %cst_5 = arith.constant 0.000000e+00 : f32
    %6 = vector.broadcast %cst_5 : f32 to vector<16x128xf32>
    %7 = arith.maximumf %5, %6 : vector<16x128xf32>
    %8 = arith.truncf %7 : vector<16x128xf32> to vector<16x128xbf16>
    %c0_6 = arith.constant 0 : index
    %c0_7 = arith.constant 0 : index
    %9 = vector.load %arg4[%c0_6, %c0_7] : memref<128x128xbf16, #tpu.memory_space<vmem>>, vector<128x128xbf16>
    %cst_8 = arith.constant dense<0.000000e+00> : vector<16x128xf32>
    %10 = tpu.matmul %8, %9, %cst_8 {dimension_numbers = #tpu.dot_dimension_numbers<[1], [0], [0], [1], [0, 0, 1, 1], [], []>} : vector<16x128xbf16>, vector<128x128xbf16>, vector<16x128xf32> -> vector<16x128xf32>
    %c0_9 = arith.constant 0 : index
    %c0_10 = arith.constant 0 : index
    %11 = vector.load %arg5[%c0_9, %c0_10] : memref<1x128xf32, #tpu.memory_space<vmem>>, vector<1x128xf32>
    %12 = vector.broadcast %11 : vector<1x128xf32> to vector<16x128xf32>
    %13 = arith.addf %10, %12 : vector<16x128xf32>
    %14 = arith.negf %13 : vector<16x128xf32>
    %15 = math.exp %14 : vector<16x128xf32>
    %cst_11 = arith.constant 1.000000e+00 : f32
    %16 = vector.broadcast %cst_11 : f32 to vector<16x128xf32>
    %17 = arith.addf %16, %15 : vector<16x128xf32>
    %18 = arith.divf %16, %17 : vector<16x128xf32>
    %c0_12 = arith.constant 0 : index
    %c0_13 = arith.constant 0 : index
    %19 = vector.load %arg6[%c0_12, %c0_13] : memref<16x128xf32, #tpu.memory_space<vmem>>, vector<16x128xf32>
    tpu.vector_store %arg6[%c0_12, %c0_13], %18 {strides = array<i32>} : memref<16x128xf32, #tpu.memory_space<vmem>>, vector<16x128xf32>,
    return
  }
  func.func @transform_0(%arg0: i32) -> (i32, i32) {
    %c0_i32 = arith.constant 0 : i32
    %c0_i32_0 = arith.constant 0 : i32
    return %arg0, %c0_i32 : i32, i32
  }
  func.func @transform_1(%arg0: i32) -> (i32, i32) {
    %c0_i32 = arith.constant 0 : i32
    %c0_i32_0 = arith.constant 0 : i32
    %c0_i32_1 = arith.constant 0 : i32
    return %c0_i32, %c0_i32_0 : i32, i32
  }
  func.func @transform_2(%arg0: i32) -> (i32, i32) {
    %c0_i32 = arith.constant 0 : i32
    %c0_i32_0 = arith.constant 0 : i32
    %c0_i32_1 = arith.constant 0 : i32
    return %c0_i32, %c0_i32_0 : i32, i32
  }
  func.func @transform_3(%arg0: i32) -> (i32, i32) {
    %c0_i32 = arith.constant 0 : i32
    %c0_i32_0 = arith.constant 0 : i32
    %c0_i32_1 = arith.constant 0 : i32
    return %c0_i32, %c0_i32_0 : i32, i32
  }
  func.func @transform_4(%arg0: i32) -> (i32, i32) {
    %c0_i32 = arith.constant 0 : i32
    %c0_i32_0 = arith.constant 0 : i32
    %c0_i32_1 = arith.constant 0 : i32
    return %c0_i32, %c0_i32_0 : i32, i32
  }
  func.func @transform_5(%arg0: i32) -> (i32, i32) {
    %c0_i32 = arith.constant 0 : i32
    %c0_i32_0 = arith.constant 0 : i32
    return %arg0, %c0_i32 : i32, i32
  }
}

</mosaic_0001>

<llo_original>
// kernel: autoencoder_forward.1
$region0: #{autoencoder_forward.1}
  #allocation0 [shape = 'u32[]', space=smem, size = 0x4, offset = 0x4, fixed_abs, tag = 'smem constant byte address 0x4 - core index']
  #allocation1 [shape = 'u32[72,128]{1,0:T(1,128)}', space=vmem, size = 0x9000, scoped, tag = 'internal scratch']
  %s0 = inlined_call_operand.vmem [shape: bf16[16,128], index: 0, kind: input, shape index: {}]
  %s1 = inlined_call_operand.vmem [shape: bf16[128,128], index: 1, kind: input, shape index: {}]
  %s2 = inlined_call_operand.vmem [shape: f32[1,128], index: 2, kind: input, shape index: {}]
  %s3 = inlined_call_operand.vmem [shape: bf16[128,128], index: 3, kind: input, shape index: {}]
  %s4 = inlined_call_operand.vmem [shape: f32[1,128], index: 4, kind: input, shape index: {}]
  %s5 = inlined_call_operand.hbm [shape: f32[16,128], index: 5, kind: output, shape index: {}]
  %s6 = sld [smem:[#allocation0]]
  $region30: #{autoencoder_forward.1} parent=0
    _
  %s8 = ssub.s32 1, %s6
  %s9 = scalar_select 0, %s8, %s6
  $region1: #{autoencoder_forward.1} parent=0
    #allocation2 [shape = 'u8[8192]{0}', space=vmem, size = 0x2000, scoped, tag = 'output window, operand 0, single buffered']
    #allocation3 [shape = 's32[1]{0}', space=sflag, size = 0x4, scoped, tag = 'scoped memory for autoencoder_forward.1']
    %10 = vsyncpa [#allocation3], 0
    // Predicated region
    $region2: #{autoencoder_forward.1} parent=1 // pred_check
      _
    $region3: #{autoencoder_forward.1} parent=1 // pred_check_branch
      %12 = sbr.rel (0) target = $region5
    $region4: #{autoencoder_forward.1} parent=1 // pred_region
      _
    $region5: #{autoencoder_forward.1} parent=1 // pred_fallthru
      _
    // Predicated region
    $region6: #{autoencoder_forward.1} parent=1 // pred_check
      _
    $region7: #{autoencoder_forward.1} parent=1 // pred_check_branch
      %14 = sbr.rel (0) target = $region9
    $region8: #{autoencoder_forward.1} parent=1 // pred_region
      _
    $region9: #{autoencoder_forward.1} parent=1 // pred_fallthru
      _
    // Predicated region
    $region10: #{autoencoder_forward.1} parent=1 // pred_check
      _
    $region11: #{autoencoder_forward.1} parent=1 // pred_check_branch
      %16 = sbr.rel (0) target = $region13
    $region12: #{autoencoder_forward.1} parent=1 // pred_region
      _
    $region13: #{autoencoder_forward.1} parent=1 // pred_fallthru
      _
    // Predicated region
    $region14: #{autoencoder_forward.1} parent=1 // pred_check
      _
    $region15: #{autoencoder_forward.1} parent=1 // pred_check_branch
      %18 = sbr.rel (0) target = $region17
    $region16: #{autoencoder_forward.1} parent=1 // pred_region
      _
    $region17: #{autoencoder_forward.1} parent=1 // pred_fallthru
      _
    // Predicated region
    $region18: #{autoencoder_forward.1} parent=1 // pred_check
      _
    $region19: #{autoencoder_forward.1} parent=1 // pred_check_branch
      %20 = sbr.rel (0) target = $region21
    $region20: #{autoencoder_forward.1} parent=1 // pred_region
      _
    $region21: #{autoencoder_forward.1} parent=1 // pred_fallthru
      _
    %v21 = vld [vmem:[%s0] sm:$0xf]
    %v22 = vld [vmem:[%s0 + $0x4] sm:$0xf]
    %v23 = vld [vmem:[%s1] sm:$0xf]
    %v24 = vld [vmem:[%s1 + $0x4] sm:$0xf]
    %v25 = vld [vmem:[%s1 + $0x8] sm:$0xf]
    %v26 = vld [vmem:[%s1 + $0xc] sm:$0xf]
    %v27 = vld [vmem:[%s1 + $0x10] sm:$0xf]
    %v28 = vld [vmem:[%s1 + $0x14] sm:$0xf]
    %v29 = vld [vmem:[%s1 + $0x18] sm:$0xf]
    %v30 = vld [vmem:[%s1 + $0x1c] sm:$0xf]
    %v31 = vld [vmem:[%s1 + $0x20] sm:$0xf]
    %v32 = vld [vmem:[%s1 + $0x24] sm:$0xf]
    %v33 = vld [vmem:[%s1 + $0x28] sm:$0xf]
    %v34 = vld [vmem:[%s1 + $0x2c] sm:$0xf]
    %v35 = vld [vmem:[%s1 + $0x30] sm:$0xf]
    %v36 = vld [vmem:[%s1 + $0x34] sm:$0xf]
    %v37 = vld [vmem:[%s1 + $0x38] sm:$0xf]
    %v38 = vld [vmem:[%s1 + $0x3c] sm:$0xf]
    %v39 = vld [vmem:[%s2] sm:$0x1]
    %v41 = vperm.slane %v39, 0
    %v45 = vunpack.c.l.b16 %v21
    %v46 = vunpack.c.l.b16 %v22
    %v47 = vpack.c.b16 %v46, %v45
    %v65 = vunpack.c.l.b16 %v23
    %v66 = vunpack.c.l.b16 %v24
    %v67 = vunpack.c.l.b16 %v25
    %v68 = vunpack.c.l.b16 %v26
    %v69 = vunpack.c.l.b16 %v27
    %v70 = vunpack.c.l.b16 %v28
    %v71 = vunpack.c.l.b16 %v29
    %v72 = vunpack.c.l.b16 %v30
    %v73 = vunpack.c.l.b16 %v31
    %v74 = vunpack.c.l.b16 %v32
    %v75 = vunpack.c.l.b16 %v33
    %v76 = vunpack.c.l.b16 %v34
    %v77 = vunpack.c.l.b16 %v35
    %v78 = vunpack.c.l.b16 %v36
    %v79 = vunpack.c.l.b16 %v37
    %v80 = vunpack.c.l.b16 %v38
    %v81 = vpack.c.b16 %v66, %v65
    %v82 = vpack.c.b16 %v68, %v67
    %v83 = vpack.c.b16 %v70, %v69
    %v84 = vpack.c.b16 %v72, %v71
    %v85 = vpack.c.b16 %v74, %v73
    %v86 = vpack.c.b16 %v76, %v75
    %v87 = vpack.c.b16 %v78, %v77
    %v88 = vpack.c.b16 %v80, %v79
    %97 = vmatpush.bf16.msra.mxu0 %v88
    %98 = vmatpush.bf16.msra.mxu0 %v87
    %99 = vmatpush.bf16.msra.mxu0 %v86
    %100 = vmatpush.bf16.msra.mxu0 %v85
    %101 = vmatpush.bf16.msra.mxu0 %v84
    %102 = vmatpush.bf16.msra.mxu0 %v83
    %103 = vmatpush.bf16.msra.mxu0 %v82
    %104 = vmatpush.bf16.msra.mxu0 %v81
    %105 = vmatmul.bf16.gmra.mxu0 %v47
    %v106 = vpop.f32.mrf.mxu0
    %v107 = vadd.f32 %v41, %v106
    %v108 = vpop.f32.mrf.mxu0
    %v109 = vadd.f32 %v41, %v108
    %110 = vdwg.mxu0
    %v111 = vmax.f32 %v107, 0.0
    %v112 = vmax.f32 %v109, 0.0
    %v113 = vpack.c.bf16 %v112, %v111
    %v114 = vld [vmem:[%s3] sm:$0xf]
    %v115 = vld [vmem:[%s3 + $0x4] sm:$0xf]
    %v116 = vld [vmem:[%s3 + $0x8] sm:$0xf]
    %v117 = vld [vmem:[%s3 + $0xc] sm:$0xf]
    %v118 = vld [vmem:[%s3 + $0x10] sm:$0xf]
    %v119 = vld [vmem:[%s3 + $0x14] sm:$0xf]
    %v120 = vld [vmem:[%s3 + $0x18] sm:$0xf]
    %v121 = vld [vmem:[%s3 + $0x1c] sm:$0xf]
    %v122 = vld [vmem:[%s3 + $0x20] sm:$0xf]
    %v123 = vld [vmem:[%s3 + $0x24] sm:$0xf]
    %v124 = vld [vmem:[%s3 + $0x28] sm:$0xf]
    %v125 = vld [vmem:[%s3 + $0x2c] sm:$0xf]
    %v126 = vld [vmem:[%s3 + $0x30] sm:$0xf]
    %v127 = vld [vmem:[%s3 + $0x34] sm:$0xf]
    %v128 = vld [vmem:[%s3 + $0x38] sm:$0xf]
    %v129 = vld [vmem:[%s3 + $0x3c] sm:$0xf]
    %v130 = vld [vmem:[%s4] sm:$0x1]
    %v132 = vperm.slane %v130, 0
    %v150 = vunpack.c.l.b16 %v114
    %v151 = vunpack.c.l.b16 %v115
    %v152 = vunpack.c.l.b16 %v116
    %v153 = vunpack.c.l.b16 %v117
    %v154 = vunpack.c.l.b16 %v118
    %v155 = vunpack.c.l.b16 %v119
    %v156 = vunpack.c.l.b16 %v120
    %v157 = vunpack.c.l.b16 %v121
    %v158 = vunpack.c.l.b16 %v122
    %v159 = vunpack.c.l.b16 %v123
    %v160 = vunpack.c.l.b16 %v124
    %v161 = vunpack.c.l.b16 %v125
    %v162 = vunpack.c.l.b16 %v126
    %v163 = vunpack.c.l.b16 %v127
    %v164 = vunpack.c.l.b16 %v128
    %v165 = vunpack.c.l.b16 %v129
    %v166 = vpack.c.b16 %v151, %v150
    %v167 = vpack.c.b16 %v153, %v152
    %v168 = vpack.c.b16 %v155, %v154
    %v169 = vpack.c.b16 %v157, %v156
    %v170 = vpack.c.b16 %v159, %v158
    %v171 = vpack.c.b16 %v161, %v160
    %v172 = vpack.c.b16 %v163, %v162
    %v173 = vpack.c.b16 %v165, %v164
    %182 = vmatpush.bf16.msra.mxu0 %v173
    %183 = vmatpush.bf16.msra.mxu0 %v172
    %184 = vmatpush.bf16.msra.mxu0 %v171
    %185 = vmatpush.bf16.msra.mxu0 %v170
    %186 = vmatpush.bf16.msra.mxu0 %v169
    %187 = vmatpush.bf16.msra.mxu0 %v168
    %188 = vmatpush.bf16.msra.mxu0 %v167
    %189 = vmatpush.bf16.msra.mxu0 %v166
    %190 = vmatmul.bf16.gmra.mxu0 %v113
    %v191 = vpop.f32.mrf.mxu0
    %v192 = vadd.f32 %v132, %v191
    %v193 = vpop.f32.mrf.mxu0
    %v194 = vadd.f32 %v132, %v193
    %195 = vdwg.mxu0
    %v196 = vxor.u32 %v192, 2147483648
    %v197 = vxor.u32 %v194, 2147483648
    %v198 = vmul.f32 %v196, 1.442695
    %v199 = vpow.pop %v198
    %v200 = vmul.f32 %v197, 1.442695
    %v201 = vpow.pop %v200
    %v202 = vadd.f32 %v199, 1.0
    %v203 = vadd.f32 %v201, 1.0
    %v204 = vrcp.pop %v202
    %v205 = vmul.f32 %v202, %v204
    %v206 = vsub.f32 1.0, %v205
    %v207 = vmul.f32 %v204, %v206
    %v208 = vadd.f32 %v204, %v207
    %vm209 = vweird.f32 %v202
    %vm210 = vweird.f32 %v204
    %vm211 = vmor %vm209, %vm210
    %v212 = vsel %vm211, %v204, %v208
    %v213 = vand.u32 2147483647, %v202
    %vm214 = vcmp.eq.f32.partialorder %v213, 8.507059e+37
    %v215 = vand.u32 %v202, 2147483648
    %v216 = vor.u32 1.1754944e-38, %v215
    %v217 = vsel %vm214, %v216, %v212
    %v218 = vmul.f32 1.0, %v217
    %v219 = vrcp.pop %v203
    %v220 = vmul.f32 %v203, %v219
    %v221 = vsub.f32 1.0, %v220
    %v222 = vmul.f32 %v219, %v221
    %v223 = vadd.f32 %v219, %v222
    %vm224 = vweird.f32 %v203
    %vm225 = vweird.f32 %v219
    %vm226 = vmor %vm224, %vm225
    %v227 = vsel %vm226, %v219, %v223
    %v228 = vand.u32 2147483647, %v203
    %vm229 = vcmp.eq.f32.partialorder %v228, 8.507059e+37
    %v230 = vand.u32 %v203, 2147483648
    %v231 = vor.u32 1.1754944e-38, %v230
    %v232 = vsel %vm229, %v231, %v227
    %v233 = vmul.f32 1.0, %v232
    %234 = vst [vmem:[#allocation2] sm:$0xff] %v218
    %235 = vst [vmem:[#allocation2 + $0x8] sm:$0xff] %v233
    // Predicated region
    $region22: #{autoencoder_forward.1} parent=1 // pred_check
      _
    $region23: #{autoencoder_forward.1} parent=1 // pred_check_branch
      %237 = sbr.rel (0) target = $region25
    $region24: #{autoencoder_forward.1} parent=1 // pred_region
      %239 = vsyncadd [#allocation3], 0
      %s240 = sshll.u32 [#allocation2], 4
      %s241 = int_to_ptr.vmem [resolvable:$true] %s240
      %s242 = sshll.u32 %s5, 4
      %s243 = int_to_ptr.hbm [resolvable:$true] %s242
      %248 = dma.vmem_to_hbm [thread:$0]  %s241, 256, %s243, [#allocation3], 128, 128, 8
    $region25: #{autoencoder_forward.1} parent=1 // pred_fallthru
      _
    // Predicated region
    $region26: #{autoencoder_forward.1} parent=1 // pred_check
      _
    $region27: #{autoencoder_forward.1} parent=1 // pred_check_branch
      %250 = sbr.rel (0) target = $region29
    $region28: #{autoencoder_forward.1} parent=1 // pred_region
      %252 = dma.done [#allocation3], 256
    $region29: #{autoencoder_forward.1} parent=1 // pred_fallthru
      _
    %253 = vsyncpa [#allocation3], 1

</llo_original>
